<compile_context>
chip_gen: v7x
topology: tpu7x:2x2x1
jax: 0.10.0
libtpu: 0.0.40
codegen_flags: <defaults>
</compile_context>

<pallas_src>
import functools

import jax
import jax.numpy as jnp
from jax.experimental import pallas as pl
from jax.experimental.pallas import tpu as pltpu


IN_FEATURES = 116
OUT_FEATURES = 20


# --------------------------------------------------------------------------
# Fused kernel: infc + all ResBlocks + all outfc in one pass.
# --------------------------------------------------------------------------
def _fused_forward_kernel(
    x_ref,        # (batch, 116)
    w_in_ref,     # (116, F)
    b_in_ref,     # (1, F)
    w1_ref,       # (L, F, F)   L = num_model * num_layer
    b1_ref,       # (L, 1, F)
    w2_ref,       # (L, F, F)
    b2_ref,       # (L, 1, F)
    w_out_ref,    # (num_model, F, 20)
    b_out_ref,    # (num_model, 1, 20)
    o_ref,        # (num_model, batch, 20)
    *,
    num_layer: int,
    num_model: int,
):
    # x = relu(infc(x))
    x = jnp.dot(x_ref[...], w_in_ref[...], preferred_element_type=jnp.float32)
    x = jnp.maximum(x + b_in_ref[...], 0.0)

    # Sequential (chained) sub-models: x carries over between them, matching
    # the PyTorch forward.
    for i in range(num_model):
        for j in range(num_layer):
            l = i * num_layer + j
            # ResBlock: relu(x + fc2(relu(fc1(x))))
            h = jnp.dot(x, w1_ref[l], preferred_element_type=jnp.float32)
            h = jnp.maximum(h + b1_ref[l], 0.0)
            h = jnp.dot(h, w2_ref[l], preferred_element_type=jnp.float32)
            h = h + b2_ref[l]
            x = jnp.maximum(x + h, 0.0)
        # Output head for sub-model i.
        y = jnp.dot(x, w_out_ref[i], preferred_element_type=jnp.float32)
        o_ref[i] = (y + b_out_ref[i]).astype(o_ref.dtype)


def fused_forward(x, params, *, num_layer, num_model):
    batch = x.shape[0]
    return pl.pallas_call(
        functools.partial(
            _fused_forward_kernel, num_layer=num_layer, num_model=num_model
        ),
        out_shape=jax.ShapeDtypeStruct((num_model, batch, OUT_FEATURES), jnp.float32),
        in_specs=[pl.BlockSpec(memory_space=pltpu.MemorySpace.VMEM)] * 9,
        out_specs=pl.BlockSpec(memory_space=pltpu.MemorySpace.VMEM),
    )(
        x,
        params["w_in"], params["b_in"],
        params["w1"], params["b1"],
        params["w2"], params["b2"],
        params["w_out"], params["b_out"],
    )


# --------------------------------------------------------------------------
# Parameter init (PyTorch-style uniform fan-in init), pre-stacked for the
# fused kernel. Weights stored as (in, out) = PyTorch weight.T; biases as
# (..., 1, out) so they broadcast directly inside the kernel.
# --------------------------------------------------------------------------
def init_params(key, num_layer, feature, num_model):
    def lin(key, fin, fout):
        k1, k2 = jax.random.split(key)
        bound = 1.0 / jnp.sqrt(fin)
        w = jax.random.uniform(k1, (fin, fout), jnp.float32, -bound, bound)
        b = jax.random.uniform(k2, (1, fout), jnp.float32, -bound, bound)
        return w, b

    n_res = num_model * num_layer
    keys = jax.random.split(key, 1 + 2 * n_res + num_model)
    it = iter(keys)

    w_in, b_in = lin(next(it), IN_FEATURES, feature)

    w1s, b1s, w2s, b2s = [], [], [], []
    for _ in range(n_res):
        w1, b1 = lin(next(it), feature, feature)
        w2, b2 = lin(next(it), feature, feature)
        w1s.append(w1); b1s.append(b1); w2s.append(w2); b2s.append(b2)

    w_outs, b_outs = [], []
    for _ in range(num_model):
        wo, bo = lin(next(it), feature, OUT_FEATURES)
        w_outs.append(wo); b_outs.append(bo)

    return {
        "w_in": w_in,                       # (116, F)
        "b_in": b_in,                       # (1, F)
        "w1": jnp.stack(w1s),               # (L, F, F)
        "b1": jnp.stack(b1s),               # (L, 1, F)
        "w2": jnp.stack(w2s),               # (L, F, F)
        "b2": jnp.stack(b2s),               # (L, 1, F)
        "w_out": jnp.stack(w_outs),         # (num_model, F, 20)
        "b_out": jnp.stack(b_outs),         # (num_model, 1, 20)
    }


# --------------------------------------------------------------------------
# Model forward: mirrors PyTorch Model.forward (returns a list of num_model
# (batch, 20) outputs), but the whole stack runs in one Pallas kernel.
# --------------------------------------------------------------------------
@functools.partial(jax.jit, static_argnames=("num_layer", "num_model"))
def model_forward(params, x, *, num_layer, num_model):
    stacked = fused_forward(x, params, num_layer=num_layer, num_model=num_model)
    return [stacked[i] for i in range(num_model)]


# --------------------------------------------------------------------------
if __name__ == "__main__":
    num_layer = 2
    feature = 32
    num_model = 2
    batch = 8

    key = jax.random.PRNGKey(0)
    k_param, k_x = jax.random.split(key)

    params = init_params(k_param, num_layer, feature, num_model)
    x = jax.random.normal(k_x, (batch, IN_FEATURES), jnp.float32)

    outs = model_forward(params, x, num_layer=num_layer, num_model=num_model)
    outs = [jax.block_until_ready(o) for o in outs]

    assert len(outs) == num_model
    for o in outs:
        assert o.shape == (batch, OUT_FEATURES), o.shape
        assert bool(jnp.all(jnp.isfinite(o)))

    print("KERNEL_OK")
</pallas_src>

<mosaic_0001>
module attributes {stable_mosaic.version = 11 : i64} {
  func.func @_fused_forward_kernel(%arg0: memref<8x116xf32, #tpu.memory_space<vmem>>, %arg1: memref<116x32xf32, #tpu.memory_space<vmem>>, %arg2: memref<1x32xf32, #tpu.memory_space<vmem>>, %arg3: memref<4x32x32xf32, #tpu.memory_space<vmem>>, %arg4: memref<4x1x32xf32, #tpu.memory_space<vmem>>, %arg5: memref<4x32x32xf32, #tpu.memory_space<vmem>>, %arg6: memref<4x1x32xf32, #tpu.memory_space<vmem>>, %arg7: memref<2x32x20xf32, #tpu.memory_space<vmem>>, %arg8: memref<2x1x20xf32, #tpu.memory_space<vmem>>, %arg9: memref<2x8x20xf32, #tpu.memory_space<vmem>>) attributes {dimension_semantics = [], scalar_prefetch = 0 : i64, scratch_operands = 0 : i64, tpu.core_type = #tpu.core_type<tc>} {
    %c0 = arith.constant 0 : index
    %c0_0 = arith.constant 0 : index
    %0 = vector.load %arg0[%c0, %c0_0] : memref<8x116xf32, #tpu.memory_space<vmem>>, vector<8x116xf32>
    %c0_1 = arith.constant 0 : index
    %c0_2 = arith.constant 0 : index
    %1 = vector.load %arg1[%c0_1, %c0_2] : memref<116x32xf32, #tpu.memory_space<vmem>>, vector<116x32xf32>
    %cst = arith.constant dense<0.000000e+00> : vector<8x32xf32>
    %2 = tpu.matmul %0, %1, %cst {dimension_numbers = #tpu.dot_dimension_numbers<[1], [0], [0], [1], [0, 0, 1, 1], [], []>} : vector<8x116xf32>, vector<116x32xf32>, vector<8x32xf32> -> vector<8x32xf32>
    %c0_3 = arith.constant 0 : index
    %c0_4 = arith.constant 0 : index
    %3 = vector.load %arg2[%c0_3, %c0_4] : memref<1x32xf32, #tpu.memory_space<vmem>>, vector<1x32xf32>
    %4 = vector.broadcast %3 : vector<1x32xf32> to vector<8x32xf32>
    %5 = arith.addf %2, %4 : vector<8x32xf32>
    %cst_5 = arith.constant 0.000000e+00 : f32
    %6 = vector.broadcast %cst_5 : f32 to vector<8x32xf32>
    %7 = arith.maximumf %5, %6 : vector<8x32xf32>
    %c0_6 = arith.constant 0 : index
    %c0_7 = arith.constant 0 : index
    %c0_8 = arith.constant 0 : index
    %8 = vector.load %arg3[%c0_6, %c0_7, %c0_8] : memref<4x32x32xf32, #tpu.memory_space<vmem>>, vector<1x32x32xf32>
    %9 = vector.shape_cast %8 : vector<1x32x32xf32> to vector<32x32xf32>
    %cst_9 = arith.constant dense<0.000000e+00> : vector<8x32xf32>
    %10 = tpu.matmul %7, %9, %cst_9 {dimension_numbers = #tpu.dot_dimension_numbers<[1], [0], [0], [1], [0, 0, 1, 1], [], []>} : vector<8x32xf32>, vector<32x32xf32>, vector<8x32xf32> -> vector<8x32xf32>
    %c0_10 = arith.constant 0 : index
    %c0_11 = arith.constant 0 : index
    %c0_12 = arith.constant 0 : index
    %11 = vector.load %arg4[%c0_10, %c0_11, %c0_12] : memref<4x1x32xf32, #tpu.memory_space<vmem>>, vector<1x1x32xf32>
    %12 = vector.shape_cast %11 : vector<1x1x32xf32> to vector<1x32xf32>
    %13 = vector.broadcast %12 : vector<1x32xf32> to vector<8x32xf32>
    %14 = arith.addf %10, %13 : vector<8x32xf32>
    %cst_13 = arith.constant 0.000000e+00 : f32
    %15 = vector.broadcast %cst_13 : f32 to vector<8x32xf32>
    %16 = arith.maximumf %14, %15 : vector<8x32xf32>
    %c0_14 = arith.constant 0 : index
    %c0_15 = arith.constant 0 : index
    %c0_16 = arith.constant 0 : index
    %17 = vector.load %arg5[%c0_14, %c0_15, %c0_16] : memref<4x32x32xf32, #tpu.memory_space<vmem>>, vector<1x32x32xf32>
    %18 = vector.shape_cast %17 : vector<1x32x32xf32> to vector<32x32xf32>
    %cst_17 = arith.constant dense<0.000000e+00> : vector<8x32xf32>
    %19 = tpu.matmul %16, %18, %cst_17 {dimension_numbers = #tpu.dot_dimension_numbers<[1], [0], [0], [1], [0, 0, 1, 1], [], []>} : vector<8x32xf32>, vector<32x32xf32>, vector<8x32xf32> -> vector<8x32xf32>
    %c0_18 = arith.constant 0 : index
    %c0_19 = arith.constant 0 : index
    %c0_20 = arith.constant 0 : index
    %20 = vector.load %arg6[%c0_18, %c0_19, %c0_20] : memref<4x1x32xf32, #tpu.memory_space<vmem>>, vector<1x1x32xf32>
    %21 = vector.shape_cast %20 : vector<1x1x32xf32> to vector<1x32xf32>
    %22 = vector.broadcast %21 : vector<1x32xf32> to vector<8x32xf32>
    %23 = arith.addf %19, %22 : vector<8x32xf32>
    %24 = arith.addf %7, %23 : vector<8x32xf32>
    %cst_21 = arith.constant 0.000000e+00 : f32
    %25 = vector.broadcast %cst_21 : f32 to vector<8x32xf32>
    %26 = arith.maximumf %24, %25 : vector<8x32xf32>
    %c1 = arith.constant 1 : index
    %c0_22 = arith.constant 0 : index
    %c0_23 = arith.constant 0 : index
    %27 = vector.load %arg3[%c1, %c0_22, %c0_23] : memref<4x32x32xf32, #tpu.memory_space<vmem>>, vector<1x32x32xf32>
    %28 = vector.shape_cast %27 : vector<1x32x32xf32> to vector<32x32xf32>
    %cst_24 = arith.constant dense<0.000000e+00> : vector<8x32xf32>
    %29 = tpu.matmul %26, %28, %cst_24 {dimension_numbers = #tpu.dot_dimension_numbers<[1], [0], [0], [1], [0, 0, 1, 1], [], []>} : vector<8x32xf32>, vector<32x32xf32>, vector<8x32xf32> -> vector<8x32xf32>
    %c1_25 = arith.constant 1 : index
    %c0_26 = arith.constant 0 : index
    %c0_27 = arith.constant 0 : index
    %30 = vector.load %arg4[%c1_25, %c0_26, %c0_27] : memref<4x1x32xf32, #tpu.memory_space<vmem>>, vector<1x1x32xf32>
    %31 = vector.shape_cast %30 : vector<1x1x32xf32> to vector<1x32xf32>
    %32 = vector.broadcast %31 : vector<1x32xf32> to vector<8x32xf32>
    %33 = arith.addf %29, %32 : vector<8x32xf32>
    %cst_28 = arith.constant 0.000000e+00 : f32
    %34 = vector.broadcast %cst_28 : f32 to vector<8x32xf32>
    %35 = arith.maximumf %33, %34 : vector<8x32xf32>
    %c1_29 = arith.constant 1 : index
    %c0_30 = arith.constant 0 : index
    %c0_31 = arith.constant 0 : index
    %36 = vector.load %arg5[%c1_29, %c0_30, %c0_31] : memref<4x32x32xf32, #tpu.memory_space<vmem>>, vector<1x32x32xf32>
    %37 = vector.shape_cast %36 : vector<1x32x32xf32> to vector<32x32xf32>
    %cst_32 = arith.constant dense<0.000000e+00> : vector<8x32xf32>
    %38 = tpu.matmul %35, %37, %cst_32 {dimension_numbers = #tpu.dot_dimension_numbers<[1], [0], [0], [1], [0, 0, 1, 1], [], []>} : vector<8x32xf32>, vector<32x32xf32>, vector<8x32xf32> -> vector<8x32xf32>
    %c1_33 = arith.constant 1 : index
    %c0_34 = arith.constant 0 : index
    %c0_35 = arith.constant 0 : index
    %39 = vector.load %arg6[%c1_33, %c0_34, %c0_35] : memref<4x1x32xf32, #tpu.memory_space<vmem>>, vector<1x1x32xf32>
    %40 = vector.shape_cast %39 : vector<1x1x32xf32> to vector<1x32xf32>
    %41 = vector.broadcast %40 : vector<1x32xf32> to vector<8x32xf32>
    %42 = arith.addf %38, %41 : vector<8x32xf32>
    %43 = arith.addf %26, %42 : vector<8x32xf32>
    %cst_36 = arith.constant 0.000000e+00 : f32
    %44 = vector.broadcast %cst_36 : f32 to vector<8x32xf32>
    %45 = arith.maximumf %43, %44 : vector<8x32xf32>
    %c0_37 = arith.constant 0 : index
    %c0_38 = arith.constant 0 : index
    %c0_39 = arith.constant 0 : index
    %46 = vector.load %arg7[%c0_37, %c0_38, %c0_39] : memref<2x32x20xf32, #tpu.memory_space<vmem>>, vector<1x32x20xf32>
    %47 = vector.shape_cast %46 : vector<1x32x20xf32> to vector<32x20xf32>
    %cst_40 = arith.constant dense<0.000000e+00> : vector<8x20xf32>
    %48 = tpu.matmul %45, %47, %cst_40 {dimension_numbers = #tpu.dot_dimension_numbers<[1], [0], [0], [1], [0, 0, 1, 1], [], []>} : vector<8x32xf32>, vector<32x20xf32>, vector<8x20xf32> -> vector<8x20xf32>
    %c0_41 = arith.constant 0 : index
    %c0_42 = arith.constant 0 : index
    %c0_43 = arith.constant 0 : index
    %49 = vector.load %arg8[%c0_41, %c0_42, %c0_43] : memref<2x1x20xf32, #tpu.memory_space<vmem>>, vector<1x1x20xf32>
    %50 = vector.shape_cast %49 : vector<1x1x20xf32> to vector<1x20xf32>
    %51 = vector.broadcast %50 : vector<1x20xf32> to vector<8x20xf32>
    %52 = arith.addf %48, %51 : vector<8x20xf32>
    %c0_44 = arith.constant 0 : index
    %c0_45 = arith.constant 0 : index
    %c0_46 = arith.constant 0 : index
    %53 = vector.load %arg9[%c0_44, %c0_45, %c0_46] : memref<2x8x20xf32, #tpu.memory_space<vmem>>, vector<1x8x20xf32>
    %54 = vector.shape_cast %53 : vector<1x8x20xf32> to vector<8x20xf32>
    %55 = vector.shape_cast %52 : vector<8x20xf32> to vector<1x8x20xf32>
    tpu.vector_store %arg9[%c0_44, %c0_45, %c0_46], %55 {strides = array<i32>} : memref<2x8x20xf32, #tpu.memory_space<vmem>>, vector<1x8x20xf32>,
    %c2 = arith.constant 2 : index
    %c0_47 = arith.constant 0 : index
    %c0_48 = arith.constant 0 : index
    %56 = vector.load %arg3[%c2, %c0_47, %c0_48] : memref<4x32x32xf32, #tpu.memory_space<vmem>>, vector<1x32x32xf32>
    %57 = vector.shape_cast %56 : vector<1x32x32xf32> to vector<32x32xf32>
    %cst_49 = arith.constant dense<0.000000e+00> : vector<8x32xf32>
    %58 = tpu.matmul %45, %57, %cst_49 {dimension_numbers = #tpu.dot_dimension_numbers<[1], [0], [0], [1], [0, 0, 1, 1], [], []>} : vector<8x32xf32>, vector<32x32xf32>, vector<8x32xf32> -> vector<8x32xf32>
    %c2_50 = arith.constant 2 : index
    %c0_51 = arith.constant 0 : index
    %c0_52 = arith.constant 0 : index
    %59 = vector.load %arg4[%c2_50, %c0_51, %c0_52] : memref<4x1x32xf32, #tpu.memory_space<vmem>>, vector<1x1x32xf32>
    %60 = vector.shape_cast %59 : vector<1x1x32xf32> to vector<1x32xf32>
    %61 = vector.broadcast %60 : vector<1x32xf32> to vector<8x32xf32>
    %62 = arith.addf %58, %61 : vector<8x32xf32>
    %cst_53 = arith.constant 0.000000e+00 : f32
    %63 = vector.broadcast %cst_53 : f32 to vector<8x32xf32>
    %64 = arith.maximumf %62, %63 : vector<8x32xf32>
    %c2_54 = arith.constant 2 : index
    %c0_55 = arith.constant 0 : index
    %c0_56 = arith.constant 0 : index
    %65 = vector.load %arg5[%c2_54, %c0_55, %c0_56] : memref<4x32x32xf32, #tpu.memory_space<vmem>>, vector<1x32x32xf32>
    %66 = vector.shape_cast %65 : vector<1x32x32xf32> to vector<32x32xf32>
    %cst_57 = arith.constant dense<0.000000e+00> : vector<8x32xf32>
    %67 = tpu.matmul %64, %66, %cst_57 {dimension_numbers = #tpu.dot_dimension_numbers<[1], [0], [0], [1], [0, 0, 1, 1], [], []>} : vector<8x32xf32>, vector<32x32xf32>, vector<8x32xf32> -> vector<8x32xf32>
    %c2_58 = arith.constant 2 : index
    %c0_59 = arith.constant 0 : index
    %c0_60 = arith.constant 0 : index
    %68 = vector.load %arg6[%c2_58, %c0_59, %c0_60] : memref<4x1x32xf32, #tpu.memory_space<vmem>>, vector<1x1x32xf32>
    %69 = vector.shape_cast %68 : vector<1x1x32xf32> to vector<1x32xf32>
    %70 = vector.broadcast %69 : vector<1x32xf32> to vector<8x32xf32>
    %71 = arith.addf %67, %70 : vector<8x32xf32>
    %72 = arith.addf %45, %71 : vector<8x32xf32>
    %cst_61 = arith.constant 0.000000e+00 : f32
    %73 = vector.broadcast %cst_61 : f32 to vector<8x32xf32>
    %74 = arith.maximumf %72, %73 : vector<8x32xf32>
    %c3 = arith.constant 3 : index
    %c0_62 = arith.constant 0 : index
    %c0_63 = arith.constant 0 : index
    %75 = vector.load %arg3[%c3, %c0_62, %c0_63] : memref<4x32x32xf32, #tpu.memory_space<vmem>>, vector<1x32x32xf32>
    %76 = vector.shape_cast %75 : vector<1x32x32xf32> to vector<32x32xf32>
    %cst_64 = arith.constant dense<0.000000e+00> : vector<8x32xf32>
    %77 = tpu.matmul %74, %76, %cst_64 {dimension_numbers = #tpu.dot_dimension_numbers<[1], [0], [0], [1], [0, 0, 1, 1], [], []>} : vector<8x32xf32>, vector<32x32xf32>, vector<8x32xf32> -> vector<8x32xf32>
    %c3_65 = arith.constant 3 : index
    %c0_66 = arith.constant 0 : index
    %c0_67 = arith.constant 0 : index
    %78 = vector.load %arg4[%c3_65, %c0_66, %c0_67] : memref<4x1x32xf32, #tpu.memory_space<vmem>>, vector<1x1x32xf32>
    %79 = vector.shape_cast %78 : vector<1x1x32xf32> to vector<1x32xf32>
    %80 = vector.broadcast %79 : vector<1x32xf32> to vector<8x32xf32>
    %81 = arith.addf %77, %80 : vector<8x32xf32>
    %cst_68 = arith.constant 0.000000e+00 : f32
    %82 = vector.broadcast %cst_68 : f32 to vector<8x32xf32>
    %83 = arith.maximumf %81, %82 : vector<8x32xf32>
    %c3_69 = arith.constant 3 : index
    %c0_70 = arith.constant 0 : index
    %c0_71 = arith.constant 0 : index
    %84 = vector.load %arg5[%c3_69, %c0_70, %c0_71] : memref<4x32x32xf32, #tpu.memory_space<vmem>>, vector<1x32x32xf32>
    %85 = vector.shape_cast %84 : vector<1x32x32xf32> to vector<32x32xf32>
    %cst_72 = arith.constant dense<0.000000e+00> : vector<8x32xf32>
    %86 = tpu.matmul %83, %85, %cst_72 {dimension_numbers = #tpu.dot_dimension_numbers<[1], [0], [0], [1], [0, 0, 1, 1], [], []>} : vector<8x32xf32>, vector<32x32xf32>, vector<8x32xf32> -> vector<8x32xf32>
    %c3_73 = arith.constant 3 : index
    %c0_74 = arith.constant 0 : index
    %c0_75 = arith.constant 0 : index
    %87 = vector.load %arg6[%c3_73, %c0_74, %c0_75] : memref<4x1x32xf32, #tpu.memory_space<vmem>>, vector<1x1x32xf32>
    %88 = vector.shape_cast %87 : vector<1x1x32xf32> to vector<1x32xf32>
    %89 = vector.broadcast %88 : vector<1x32xf32> to vector<8x32xf32>
    %90 = arith.addf %86, %89 : vector<8x32xf32>
    %91 = arith.addf %74, %90 : vector<8x32xf32>
    %cst_76 = arith.constant 0.000000e+00 : f32
    %92 = vector.broadcast %cst_76 : f32 to vector<8x32xf32>
    %93 = arith.maximumf %91, %92 : vector<8x32xf32>
    %c1_77 = arith.constant 1 : index
    %c0_78 = arith.constant 0 : index
    %c0_79 = arith.constant 0 : index
    %94 = vector.load %arg7[%c1_77, %c0_78, %c0_79] : memref<2x32x20xf32, #tpu.memory_space<vmem>>, vector<1x32x20xf32>
    %95 = vector.shape_cast %94 : vector<1x32x20xf32> to vector<32x20xf32>
    %cst_80 = arith.constant dense<0.000000e+00> : vector<8x20xf32>
    %96 = tpu.matmul %93, %95, %cst_80 {dimension_numbers = #tpu.dot_dimension_numbers<[1], [0], [0], [1], [0, 0, 1, 1], [], []>} : vector<8x32xf32>, vector<32x20xf32>, vector<8x20xf32> -> vector<8x20xf32>
    %c1_81 = arith.constant 1 : index
    %c0_82 = arith.constant 0 : index
    %c0_83 = arith.constant 0 : index
    %97 = vector.load %arg8[%c1_81, %c0_82, %c0_83] : memref<2x1x20xf32, #tpu.memory_space<vmem>>, vector<1x1x20xf32>
    %98 = vector.shape_cast %97 : vector<1x1x20xf32> to vector<1x20xf32>
    %99 = vector.broadcast %98 : vector<1x20xf32> to vector<8x20xf32>
    %100 = arith.addf %96, %99 : vector<8x20xf32>
    %c1_84 = arith.constant 1 : index
    %c0_85 = arith.constant 0 : index
    %c0_86 = arith.constant 0 : index
    %101 = vector.load %arg9[%c1_84, %c0_85, %c0_86] : memref<2x8x20xf32, #tpu.memory_space<vmem>>, vector<1x8x20xf32>
    %102 = vector.shape_cast %101 : vector<1x8x20xf32> to vector<8x20xf32>
    %103 = vector.shape_cast %100 : vector<8x20xf32> to vector<1x8x20xf32>
    tpu.vector_store %arg9[%c1_84, %c0_85, %c0_86], %103 {strides = array<i32>} : memref<2x8x20xf32, #tpu.memory_space<vmem>>, vector<1x8x20xf32>,
    return
  }
}

</mosaic_0001>

<llo_original>
// kernel: model_forward.1
$region0: #{model_forward.1}
  #allocation0 [shape = 'u32[]', space=smem, size = 0x4, offset = 0x4, fixed_abs, tag = 'smem constant byte address 0x4 - core index']
  #allocation1 [shape = 'u32[144,128]{1,0:T(1,128)}', space=vmem, size = 0x12000, scoped, tag = 'internal scratch']
  %s0 = inlined_call_operand.vmem [shape: f32[8,116], index: 0, kind: input, shape index: {}]
  %s1 = inlined_call_operand.vmem [shape: f32[116,32], index: 1, kind: input, shape index: {}]
  %s2 = inlined_call_operand.vmem [shape: f32[1,32], index: 2, kind: input, shape index: {}]
  %s3 = inlined_call_operand.vmem [shape: f32[4,32,32], index: 3, kind: input, shape index: {}]
  %s4 = inlined_call_operand.hbm [shape: f32[4,1,32], index: 4, kind: input, shape index: {}]
  %s5 = inlined_call_operand.vmem [shape: f32[4,32,32], index: 5, kind: input, shape index: {}]
  %s6 = inlined_call_operand.hbm [shape: f32[4,1,32], index: 6, kind: input, shape index: {}]
  %s7 = inlined_call_operand.vmem [shape: f32[2,32,20], index: 7, kind: input, shape index: {}]
  %s8 = inlined_call_operand.vmem [shape: f32[2,1,20], index: 8, kind: input, shape index: {}]
  %s9 = inlined_call_operand.vmem [shape: f32[2,8,20], index: 9, kind: output, shape index: {}]
  %s10 = sld [smem:[#allocation0]]
  $region54: #{model_forward.1} parent=0
    _
  %s12 = ssub.s32 1, %s10
  %s13 = scalar_select 0, %s12, %s10
  $region1: #{model_forward.1} parent=0
    #allocation2 [shape = 'u8[2048]{0}', space=vmem, size = 0x800, scoped, tag = 'input window, operand 4, single buffered']
    #allocation3 [shape = 's32[1]{0}', space=sflag, size = 0x4, scoped, tag = 'scoped memory for model_forward.1']
    #allocation4 [shape = 'u8[2048]{0}', space=vmem, size = 0x800, scoped, tag = 'input window, operand 6, single buffered']
    #allocation5 [shape = 's32[1]{0}', space=sflag, size = 0x4, scoped, tag = 'scoped memory for model_forward.1']
    %14 = vsyncpa [#allocation3], 0
    %15 = vsyncpa [#allocation5], 0
    // Predicated region
    $region2: #{model_forward.1} parent=1 // pred_check
      _
    $region3: #{model_forward.1} parent=1 // pred_check_branch
      %17 = sbr.rel (0) target = $region5
    $region4: #{model_forward.1} parent=1 // pred_region
      _
    $region5: #{model_forward.1} parent=1 // pred_fallthru
      _
    // Predicated region
    $region6: #{model_forward.1} parent=1 // pred_check
      _
    $region7: #{model_forward.1} parent=1 // pred_check_branch
      %19 = sbr.rel (0) target = $region9
    $region8: #{model_forward.1} parent=1 // pred_region
      _
    $region9: #{model_forward.1} parent=1 // pred_fallthru
      _
    // Predicated region
    $region10: #{model_forward.1} parent=1 // pred_check
      _
    $region11: #{model_forward.1} parent=1 // pred_check_branch
      %21 = sbr.rel (0) target = $region13
    $region12: #{model_forward.1} parent=1 // pred_region
      _
    $region13: #{model_forward.1} parent=1 // pred_fallthru
      _
    // Predicated region
    $region14: #{model_forward.1} parent=1 // pred_check
      _
    $region15: #{model_forward.1} parent=1 // pred_check_branch
      %23 = sbr.rel (0) target = $region17
    $region16: #{model_forward.1} parent=1 // pred_region
      _
    $region17: #{model_forward.1} parent=1 // pred_fallthru
      _
    // Predicated region
    $region18: #{model_forward.1} parent=1 // pred_check
      _
    $region19: #{model_forward.1} parent=1 // pred_check_branch
      %25 = sbr.rel (0) target = $region21
    $region20: #{model_forward.1} parent=1 // pred_region
      %s27 = ssub.s32 64, 64
      %28 = vsyncadd [#allocation3], %s27
      %s29 = sshll.u32 [#allocation2], 4
      %s30 = int_to_ptr.vmem [resolvable:$true] %s29
      %35 = dma.hbm_to_vmem [thread:$0]  %s4, 64, %s30, [#allocation3], 16, 16, 1
    $region21: #{model_forward.1} parent=1 // pred_fallthru
      _
    // Predicated region
    $region22: #{model_forward.1} parent=1 // pred_check
      _
    $region23: #{model_forward.1} parent=1 // pred_check_branch
      %37 = sbr.rel (0) target = $region25
    $region24: #{model_forward.1} parent=1 // pred_region
      _
    $region25: #{model_forward.1} parent=1 // pred_fallthru
      _
    // Predicated region
    $region26: #{model_forward.1} parent=1 // pred_check
      _
    $region27: #{model_forward.1} parent=1 // pred_check_branch
      %39 = sbr.rel (0) target = $region29
    $region28: #{model_forward.1} parent=1 // pred_region
      %s41 = ssub.s32 64, 64
      %42 = vsyncadd [#allocation5], %s41
      %s43 = sshll.u32 [#allocation4], 4
      %s44 = int_to_ptr.vmem [resolvable:$true] %s43
      %49 = dma.hbm_to_vmem [thread:$0]  %s6, 64, %s44, [#allocation5], 16, 16, 1
    $region29: #{model_forward.1} parent=1 // pred_fallthru
      _
    // Predicated region
    $region30: #{model_forward.1} parent=1 // pred_check
      _
    $region31: #{model_forward.1} parent=1 // pred_check_branch
      %51 = sbr.rel (0) target = $region33
    $region32: #{model_forward.1} parent=1 // pred_region
      _
    $region33: #{model_forward.1} parent=1 // pred_fallthru
      _
    // Predicated region
    $region34: #{model_forward.1} parent=1 // pred_check
      _
    $region35: #{model_forward.1} parent=1 // pred_check_branch
      %53 = sbr.rel (0) target = $region37
    $region36: #{model_forward.1} parent=1 // pred_region
      _
    $region37: #{model_forward.1} parent=1 // pred_fallthru
      _
    // Predicated region
    $region38: #{model_forward.1} parent=1 // pred_check
      _
    $region39: #{model_forward.1} parent=1 // pred_check_branch
      %55 = sbr.rel (0) target = $region41
    $region40: #{model_forward.1} parent=1 // pred_region
      %56 = dma.done [#allocation3], 64
    $region41: #{model_forward.1} parent=1 // pred_fallthru
      _
    // Predicated region
    $region42: #{model_forward.1} parent=1 // pred_check
      _
    $region43: #{model_forward.1} parent=1 // pred_check_branch
      %58 = sbr.rel (0) target = $region45
    $region44: #{model_forward.1} parent=1 // pred_region
      %59 = dma.done [#allocation5], 64
    $region45: #{model_forward.1} parent=1 // pred_fallthru
      _
    %v60 = vld [vmem:[%s0] sm:$0xff]
    %v61 = vld [vmem:[%s1] sm:$0xff]
    %v62 = vld [vmem:[%s1 + $0x8] sm:$0xff]
    %v63 = vld [vmem:[%s1 + $0x10] sm:$0xff]
    %v64 = vld [vmem:[%s1 + $0x18] sm:$0xff]
    %v65 = vld [vmem:[%s1 + $0x20] sm:$0xff]
    %v66 = vld [vmem:[%s1 + $0x28] sm:$0xff]
    %v67 = vld [vmem:[%s1 + $0x30] sm:$0xff]
    %v68 = vld [vmem:[%s1 + $0x38] sm:$0xff]
    %v69 = vld [vmem:[%s1 + $0x40] sm:$0xff]
    %v70 = vld [vmem:[%s1 + $0x48] sm:$0xff]
    %v71 = vld [vmem:[%s1 + $0x50] sm:$0xff]
    %v72 = vld [vmem:[%s1 + $0x58] sm:$0xff]
    %v73 = vld [vmem:[%s1 + $0x60] sm:$0xff]
    %v74 = vld [vmem:[%s1 + $0x68] sm:$0xff]
    %v75 = vld [vmem:[%s1 + $0x70] sm:$0xf]
    %v76 = vld [vmem:[%s2] sm:$0x1]
    %v78 = vlaneseq
    %v79 = vshrl.u32 %v78, 7
    %v80 = vsub.s32 0, %v79
    %v81 = vrot.slane %v76, %v80
    %vm83 = vcmask 949248
    %v85 = vsel %vm83, %v60, 0
    %vm87 = vcmask 1043456
    %v89 = vsel %vm87, %v75, 0
    %91 = vmatprep.subr.mxu0 0.0
    %92 = vmatpush1.msra.mxu0 %v61
    %93 = vmatprep.subr.mxu0 0.0
    %94 = vmatpush1.msra.mxu0 %v62
    %95 = vmatprep.subr.mxu0 0.0
    %96 = vmatpush1.msra.mxu0 %v63
    %97 = vmatprep.subr.mxu0 0.0
    %98 = vmatpush1.msra.mxu0 %v64
    %99 = vmatprep.subr.mxu0 0.0
    %100 = vmatpush1.msra.mxu0 %v65
    %101 = vmatprep.subr.mxu0 0.0
    %102 = vmatpush1.msra.mxu0 %v66
    %103 = vmatprep.subr.mxu0 0.0
    %104 = vmatpush1.msra.mxu0 %v67
    %105 = vmatprep.subr.mxu0 0.0
    %106 = vmatpush1.msra.mxu0 %v68
    %107 = vmatprep.subr.mxu0 0.0
    %108 = vmatpush1.msra.mxu0 %v69
    %109 = vmatprep.subr.mxu0 0.0
    %110 = vmatpush1.msra.mxu0 %v70
    %111 = vmatprep.subr.mxu0 0.0
    %112 = vmatpush1.msra.mxu0 %v71
    %113 = vmatprep.subr.mxu0 0.0
    %114 = vmatpush1.msra.mxu0 %v72
    %115 = vmatprep.subr.mxu0 0.0
    %116 = vmatpush1.msra.mxu0 %v73
    %117 = vmatprep.subr.mxu0 0.0
    %118 = vmatpush1.msra.mxu0 %v74
    %119 = vmatprep.subr.mxu0 0.0
    %120 = vmatpush1.msra.mxu0 %v89
    %121 = vmatprep.subr.mxu0 0.0
    %122 = vmatpush1.msra.mxu0 0.0
    %123 = vmatprep.subr.mxu0 0.0
    %124 = vmatpush1.msra.mxu0 0.0
    %125 = vmatprep.subr.mxu0 0.0
    %126 = vmatpush1.msra.mxu0 0.0
    %127 = vmatprep.subr.mxu0 0.0
    %128 = vmatpush1.msra.mxu0 0.0
    %129 = vmatprep.subr.mxu0 0.0
    %130 = vmatpush1.msra.mxu0 0.0
    %131 = vmatprep.subr.mxu0 0.0
    %132 = vmatpush1.msra.mxu0 0.0
    %133 = vmatprep.subr.mxu0 0.0
    %134 = vmatpush1.msra.mxu0 0.0
    %135 = vmatprep.subr.mxu0 0.0
    %136 = vmatpush1.msra.mxu0 0.0
    %137 = vmatprep.subr.mxu0 0.0
    %138 = vmatpush1.msra.mxu0 0.0
    %139 = vmatprep.subr.mxu0 0.0
    %140 = vmatpush1.msra.mxu0 0.0
    %141 = vmatprep.subr.mxu0 0.0
    %142 = vmatpush1.msra.mxu0 0.0
    %143 = vmatprep.subr.mxu0 0.0
    %144 = vmatpush1.msra.mxu0 0.0
    %145 = vmatprep.subr.mxu0 0.0
    %146 = vmatpush1.msra.mxu0 0.0
    %147 = vmatprep.subr.mxu0 0.0
    %148 = vmatpush1.msra.mxu0 0.0
    %149 = vmatprep.subr.mxu0 0.0
    %150 = vmatpush1.msra.mxu0 0.0
    %151 = vmatprep.subr.mxu0 0.0
    %152 = vmatpush1.msra.mxu0 0.0
    %153 = vmatprep.subr.mxu0 0.0
    %154 = vmatpush1.msra.mxu0 0.0
    %155 = vmatprep.mubr.f32.mxu0 0.0
    %156 = vmatmul.mubr.f32.gmra.mrb[0].mxu0 %v85
    %v157 = vpop.f32.mrb[0].mxu0
    %v158 = vadd.f32 %v81, %v157
    %v159 = vpop.f32.mrb[0].mxu0
    %160 = vdwg.mxu0
    %v161 = vmax.f32 %v158, 0.0
    %v162 = vld [vmem:[%s3] sm:$0xff]
    %v163 = vld [vmem:[%s3 + $0x8] sm:$0xff]
    %v164 = vld [vmem:[%s3 + $0x10] sm:$0xff]
    %v165 = vld [vmem:[%s3 + $0x18] sm:$0xff]
    %v166 = vld [vmem:[#allocation2] sm:$0x1]
    %v168 = vlaneseq
    %v169 = vshrl.u32 %v168, 7
    %v170 = vsub.s32 0, %v169
    %v171 = vrot.slane %v166, %v170
    %vm173 = vcmask 261120
    %v175 = vsel %vm173, %v161, 0
    %177 = vmatprep.subr.mxu0 0.0
    %178 = vmatpush1.msra.mxu0 %v162
    %179 = vmatprep.subr.mxu0 0.0
    %180 = vmatpush1.msra.mxu0 %v163
    %181 = vmatprep.subr.mxu0 0.0
    %182 = vmatpush1.msra.mxu0 %v164
    %183 = vmatprep.subr.mxu0 0.0
    %184 = vmatpush1.msra.mxu0 %v165
    %185 = vmatprep.subr.mxu0 0.0
    %186 = vmatpush1.msra.mxu0 0.0
    %187 = vmatprep.subr.mxu0 0.0
    %188 = vmatpush1.msra.mxu0 0.0
    %189 = vmatprep.subr.mxu0 0.0
    %190 = vmatpush1.msra.mxu0 0.0
    %191 = vmatprep.subr.mxu0 0.0
    %192 = vmatpush1.msra.mxu0 0.0
    %193 = vmatprep.subr.mxu0 0.0
    %194 = vmatpush1.msra.mxu0 0.0
    %195 = vmatprep.subr.mxu0 0.0
    %196 = vmatpush1.msra.mxu0 0.0
    %197 = vmatprep.subr.mxu0 0.0
    %198 = vmatpush1.msra.mxu0 0.0
    %199 = vmatprep.subr.mxu0 0.0
    %200 = vmatpush1.msra.mxu0 0.0
    %201 = vmatprep.subr.mxu0 0.0
    %202 = vmatpush1.msra.mxu0 0.0
    %203 = vmatprep.subr.mxu0 0.0
    %204 = vmatpush1.msra.mxu0 0.0
    %205 = vmatprep.subr.mxu0 0.0
    %206 = vmatpush1.msra.mxu0 0.0
    %207 = vmatprep.subr.mxu0 0.0
    %208 = vmatpush1.msra.mxu0 0.0
    %209 = vmatprep.subr.mxu0 0.0
    %210 = vmatpush1.msra.mxu0 0.0
    %211 = vmatprep.subr.mxu0 0.0
    %212 = vmatpush1.msra.mxu0 0.0
    %213 = vmatprep.subr.mxu0 0.0
    %214 = vmatpush1.msra.mxu0 0.0
    %215 = vmatprep.subr.mxu0 0.0
    %216 = vmatpush1.msra.mxu0 0.0
    %217 = vmatprep.subr.mxu0 0.0
    %218 = vmatpush1.msra.mxu0 0.0
    %219 = vmatprep.subr.mxu0 0.0
    %220 = vmatpush1.msra.mxu0 0.0
    %221 = vmatprep.subr.mxu0 0.0
    %222 = vmatpush1.msra.mxu0 0.0
    %223 = vmatprep.subr.mxu0 0.0
    %224 = vmatpush1.msra.mxu0 0.0
    %225 = vmatprep.subr.mxu0 0.0
    %226 = vmatpush1.msra.mxu0 0.0
    %227 = vmatprep.subr.mxu0 0.0
    %228 = vmatpush1.msra.mxu0 0.0
    %229 = vmatprep.subr.mxu0 0.0
    %230 = vmatpush1.msra.mxu0 0.0
    %231 = vmatprep.subr.mxu0 0.0
    %232 = vmatpush1.msra.mxu0 0.0
    %233 = vmatprep.subr.mxu0 0.0
    %234 = vmatpush1.msra.mxu0 0.0
    %235 = vmatprep.subr.mxu0 0.0
    %236 = vmatpush1.msra.mxu0 0.0
    %237 = vmatprep.subr.mxu0 0.0
    %238 = vmatpush1.msra.mxu0 0.0
    %239 = vmatprep.subr.mxu0 0.0
    %240 = vmatpush1.msra.mxu0 0.0
    %241 = vmatprep.mubr.f32.mxu0 0.0
    %242 = vmatmul.mubr.f32.gmra.mrb[0].mxu0 %v175
    %v243 = vpop.f32.mrb[0].mxu0
    %v244 = vadd.f32 %v171, %v243
    %v245 = vpop.f32.mrb[0].mxu0
    %246 = vdwg.mxu0
    %v247 = vmax.f32 %v244, 0.0
    %v248 = vld [vmem:[%s5] sm:$0xff]
    %v249 = vld [vmem:[%s5 + $0x8] sm:$0xff]
    %v250 = vld [vmem:[%s5 + $0x10] sm:$0xff]
    %v251 = vld [vmem:[%s5 + $0x18] sm:$0xff]
    %v252 = vld [vmem:[#allocation4] sm:$0x1]
    %v254 = vlaneseq
    %v255 = vshrl.u32 %v254, 7
    %v256 = vsub.s32 0, %v255
    %v257 = vrot.slane %v252, %v256
    %v260 = vsel %vm173, %v247, 0
    %262 = vmatprep.subr.mxu0 0.0
    %263 = vmatpush1.msra.mxu0 %v248
    %264 = vmatprep.subr.mxu0 0.0
    %265 = vmatpush1.msra.mxu0 %v249
    %266 = vmatprep.subr.mxu0 0.0
    %267 = vmatpush1.msra.mxu0 %v250
    %268 = vmatprep.subr.mxu0 0.0
    %269 = vmatpush1.msra.mxu0 %v251
    %270 = vmatprep.subr.mxu0 0.0
    %271 = vmatpush1.msra.mxu0 0.0
    %272 = vmatprep.subr.mxu0 0.0
    %273 = vmatpush1.msra.mxu0 0.0
    %274 = vmatprep.subr.mxu0 0.0
    %275 = vmatpush1.msra.mxu0 0.0
    %276 = vmatprep.subr.mxu0 0.0
    %277 = vmatpush1.msra.mxu0 0.0
    %278 = vmatprep.subr.mxu0 0.0
    %279 = vmatpush1.msra.mxu0 0.0
    %280 = vmatprep.subr.mxu0 0.0
    %281 = vmatpush1.msra.mxu0 0.0
    %282 = vmatprep.subr.mxu0 0.0
    %283 = vmatpush1.msra.mxu0 0.0
    %284 = vmatprep.subr.mxu0 0.0
    %285 = vmatpush1.msra.mxu0 0.0
    %286 = vmatprep.subr.mxu0 0.0
    %287 = vmatpush1.msra.mxu0 0.0
    %288 = vmatprep.subr.mxu0 0.0
    %289 = vmatpush1.msra.mxu0 0.0
    %290 = vmatprep.subr.mxu0 0.0
    %291 = vmatpush1.msra.mxu0 0.0
    %292 = vmatprep.subr.mxu0 0.0
    %293 = vmatpush1.msra.mxu0 0.0
    %294 = vmatprep.subr.mxu0 0.0
    %295 = vmatpush1.msra.mxu0 0.0
    %296 = vmatprep.subr.mxu0 0.0
    %297 = vmatpush1.msra.mxu0 0.0
    %298 = vmatprep.subr.mxu0 0.0
    %299 = vmatpush1.msra.mxu0 0.0
    %300 = vmatprep.subr.mxu0 0.0
    %301 = vmatpush1.msra.mxu0 0.0
    %302 = vmatprep.subr.mxu0 0.0
    %303 = vmatpush1.msra.mxu0 0.0
    %304 = vmatprep.subr.mxu0 0.0
    %305 = vmatpush1.msra.mxu0 0.0
    %306 = vmatprep.subr.mxu0 0.0
    %307 = vmatpush1.msra.mxu0 0.0
    %308 = vmatprep.subr.mxu0 0.0
    %309 = vmatpush1.msra.mxu0 0.0
    %310 = vmatprep.subr.mxu0 0.0
    %311 = vmatpush1.msra.mxu0 0.0
    %312 = vmatprep.subr.mxu0 0.0
    %313 = vmatpush1.msra.mxu0 0.0
    %314 = vmatprep.subr.mxu0 0.0
    %315 = vmatpush1.msra.mxu0 0.0
    %316 = vmatprep.subr.mxu0 0.0
    %317 = vmatpush1.msra.mxu0 0.0
    %318 = vmatprep.subr.mxu0 0.0
    %319 = vmatpush1.msra.mxu0 0.0
    %320 = vmatprep.subr.mxu0 0.0
    %321 = vmatpush1.msra.mxu0 0.0
    %322 = vmatprep.subr.mxu0 0.0
    %323 = vmatpush1.msra.mxu0 0.0
    %324 = vmatprep.subr.mxu0 0.0
    %325 = vmatpush1.msra.mxu0 0.0
    %326 = vmatprep.mubr.f32.mxu0 0.0
    %327 = vmatmul.mubr.f32.gmra.mrb[0].mxu0 %v260
    %v328 = vpop.f32.mrb[0].mxu0
    %v329 = vadd.f32 %v257, %v328
    %v330 = vpop.f32.mrb[0].mxu0
    %331 = vdwg.mxu0
    %v332 = vadd.f32 %v161, %v329
    %v333 = vmax.f32 %v332, 0.0
    %s334 = scalar_lea.vmem %s3, 32
    %v335 = vld [vmem:[%s334] sm:$0xff]
    %v336 = vld [vmem:[%s334 + $0x8] sm:$0xff]
    %v337 = vld [vmem:[%s334 + $0x10] sm:$0xff]
    %v338 = vld [vmem:[%s334 + $0x18] sm:$0xff]
    %s339 = scalar_lea.vmem [#allocation2], 1
    %v340 = vld [vmem:[%s339] sm:$0x1]
    %v342 = vlaneseq
    %v343 = vshrl.u32 %v342, 7
    %v344 = vsub.s32 0, %v343
    %v345 = vrot.slane %v340, %v344
    %v348 = vsel %vm173, %v333, 0
    %350 = vmatprep.subr.mxu0 0.0
    %351 = vmatpush1.msra.mxu0 %v335
    %352 = vmatprep.subr.mxu0 0.0
    %353 = vmatpush1.msra.mxu0 %v336
    %354 = vmatprep.subr.mxu0 0.0
    %355 = vmatpush1.msra.mxu0 %v337
    %356 = vmatprep.subr.mxu0 0.0
    %357 = vmatpush1.msra.mxu0 %v338
    %358 = vmatprep.subr.mxu0 0.0
    %359 = vmatpush1.msra.mxu0 0.0
    %360 = vmatprep.subr.mxu0 0.0
    %361 = vmatpush1.msra.mxu0 0.0
    %362 = vmatprep.subr.mxu0 0.0
    %363 = vmatpush1.msra.mxu0 0.0
    %364 = vmatprep.subr.mxu0 0.0
    %365 = vmatpush1.msra.mxu0 0.0
    %366 = vmatprep.subr.mxu0 0.0
    %367 = vmatpush1.msra.mxu0 0.0
    %368 = vmatprep.subr.mxu0 0.0
    %369 = vmatpush1.msra.mxu0 0.0
    %370 = vmatprep.subr.mxu0 0.0
    %371 = vmatpush1.msra.mxu0 0.0
    %372 = vmatprep.subr.mxu0 0.0
    %373 = vmatpush1.msra.mxu0 0.0
    %374 = vmatprep.subr.mxu0 0.0
    %375 = vmatpush1.msra.mxu0 0.0
    %376 = vmatprep.subr.mxu0 0.0
    %377 = vmatpush1.msra.mxu0 0.0
    %378 = vmatprep.subr.mxu0 0.0
    %379 = vmatpush1.msra.mxu0 0.0
    %380 = vmatprep.subr.mxu0 0.0
    %381 = vmatpush1.msra.mxu0 0.0
    %382 = vmatprep.subr.mxu0 0.0
    %383 = vmatpush1.msra.mxu0 0.0
    %384 = vmatprep.subr.mxu0 0.0
    %385 = vmatpush1.msra.mxu0 0.0
    %386 = vmatprep.subr.mxu0 0.0
    %387 = vmatpush1.msra.mxu0 0.0
    %388 = vmatprep.subr.mxu0 0.0
    %389 = vmatpush1.msra.mxu0 0.0
    %390 = vmatprep.subr.mxu0 0.0
    %391 = vmatpush1.msra.mxu0 0.0
    %392 = vmatprep.subr.mxu0 0.0
    %393 = vmatpush1.msra.mxu0 0.0
    %394 = vmatprep.subr.mxu0 0.0
    %395 = vmatpush1.msra.mxu0 0.0
    %396 = vmatprep.subr.mxu0 0.0
    %397 = vmatpush1.msra.mxu0 0.0
    %398 = vmatprep.subr.mxu0 0.0
    %399 = vmatpush1.msra.mxu0 0.0
    %400 = vmatprep.subr.mxu0 0.0
    %401 = vmatpush1.msra.mxu0 0.0
    %402 = vmatprep.subr.mxu0 0.0
    %403 = vmatpush1.msra.mxu0 0.0
    %404 = vmatprep.subr.mxu0 0.0
    %405 = vmatpush1.msra.mxu0 0.0
    %406 = vmatprep.subr.mxu0 0.0
    %407 = vmatpush1.msra.mxu0 0.0
    %408 = vmatprep.subr.mxu0 0.0
    %409 = vmatpush1.msra.mxu0 0.0
    %410 = vmatprep.subr.mxu0 0.0
    %411 = vmatpush1.msra.mxu0 0.0
    %412 = vmatprep.subr.mxu0 0.0
    %413 = vmatpush1.msra.mxu0 0.0
    %414 = vmatprep.mubr.f32.mxu0 0.0
    %415 = vmatmul.mubr.f32.gmra.mrb[0].mxu0 %v348
    %v416 = vpop.f32.mrb[0].mxu0
    %v417 = vadd.f32 %v345, %v416
    %v418 = vpop.f32.mrb[0].mxu0
    %419 = vdwg.mxu0
    %v420 = vmax.f32 %v417, 0.0
    %s421 = scalar_lea.vmem %s5, 32
    %v422 = vld [vmem:[%s421] sm:$0xff]
    %v423 = vld [vmem:[%s421 + $0x8] sm:$0xff]
    %v424 = vld [vmem:[%s421 + $0x10] sm:$0xff]
    %v425 = vld [vmem:[%s421 + $0x18] sm:$0xff]
    %s426 = scalar_lea.vmem [#allocation4], 1
    %v427 = vld [vmem:[%s426] sm:$0x1]
    %v429 = vlaneseq
    %v430 = vshrl.u32 %v429, 7
    %v431 = vsub.s32 0, %v430
    %v432 = vrot.slane %v427, %v431
    %v435 = vsel %vm173, %v420, 0
    %437 = vmatprep.subr.mxu0 0.0
    %438 = vmatpush1.msra.mxu0 %v422
    %439 = vmatprep.subr.mxu0 0.0
    %440 = vmatpush1.msra.mxu0 %v423
    %441 = vmatprep.subr.mxu0 0.0
    %442 = vmatpush1.msra.mxu0 %v424
    %443 = vmatprep.subr.mxu0 0.0
    %444 = vmatpush1.msra.mxu0 %v425
    %445 = vmatprep.subr.mxu0 0.0
    %446 = vmatpush1.msra.mxu0 0.0
    %447 = vmatprep.subr.mxu0 0.0
    %448 = vmatpush1.msra.mxu0 0.0
    %449 = vmatprep.subr.mxu0 0.0
    %450 = vmatpush1.msra.mxu0 0.0
    %451 = vmatprep.subr.mxu0 0.0
    %452 = vmatpush1.msra.mxu0 0.0
    %453 = vmatprep.subr.mxu0 0.0
    %454 = vmatpush1.msra.mxu0 0.0
    %455 = vmatprep.subr.mxu0 0.0
    %456 = vmatpush1.msra.mxu0 0.0
    %457 = vmatprep.subr.mxu0 0.0
    %458 = vmatpush1.msra.mxu0 0.0
    %459 = vmatprep.subr.mxu0 0.0
    %460 = vmatpush1.msra.mxu0 0.0
    %461 = vmatprep.subr.mxu0 0.0
    %462 = vmatpush1.msra.mxu0 0.0
    %463 = vmatprep.subr.mxu0 0.0
    %464 = vmatpush1.msra.mxu0 0.0
    %465 = vmatprep.subr.mxu0 0.0
    %466 = vmatpush1.msra.mxu0 0.0
    %467 = vmatprep.subr.mxu0 0.0
    %468 = vmatpush1.msra.mxu0 0.0
    %469 = vmatprep.subr.mxu0 0.0
    %470 = vmatpush1.msra.mxu0 0.0
    %471 = vmatprep.subr.mxu0 0.0
    %472 = vmatpush1.msra.mxu0 0.0
    %473 = vmatprep.subr.mxu0 0.0
    %474 = vmatpush1.msra.mxu0 0.0
    %475 = vmatprep.subr.mxu0 0.0
    %476 = vmatpush1.msra.mxu0 0.0
    %477 = vmatprep.subr.mxu0 0.0
    %478 = vmatpush1.msra.mxu0 0.0
    %479 = vmatprep.subr.mxu0 0.0
    %480 = vmatpush1.msra.mxu0 0.0
    %481 = vmatprep.subr.mxu0 0.0
    %482 = vmatpush1.msra.mxu0 0.0
    %483 = vmatprep.subr.mxu0 0.0
    %484 = vmatpush1.msra.mxu0 0.0
    %485 = vmatprep.subr.mxu0 0.0
    %486 = vmatpush1.msra.mxu0 0.0
    %487 = vmatprep.subr.mxu0 0.0
    %488 = vmatpush1.msra.mxu0 0.0
    %489 = vmatprep.subr.mxu0 0.0
    %490 = vmatpush1.msra.mxu0 0.0
    %491 = vmatprep.subr.mxu0 0.0
    %492 = vmatpush1.msra.mxu0 0.0
    %493 = vmatprep.subr.mxu0 0.0
    %494 = vmatpush1.msra.mxu0 0.0
    %495 = vmatprep.subr.mxu0 0.0
    %496 = vmatpush1.msra.mxu0 0.0
    %497 = vmatprep.subr.mxu0 0.0
    %498 = vmatpush1.msra.mxu0 0.0
    %499 = vmatprep.subr.mxu0 0.0
    %500 = vmatpush1.msra.mxu0 0.0
    %501 = vmatprep.mubr.f32.mxu0 0.0
    %502 = vmatmul.mubr.f32.gmra.mrb[0].mxu0 %v435
    %v503 = vpop.f32.mrb[0].mxu0
    %v504 = vadd.f32 %v432, %v503
    %v505 = vpop.f32.mrb[0].mxu0
    %506 = vdwg.mxu0
    %v507 = vadd.f32 %v333, %v504
    %v508 = vmax.f32 %v507, 0.0
    %v509 = vld [vmem:[%s7] sm:$0xff]
    %v510 = vld [vmem:[%s7 + $0x8] sm:$0xff]
    %v511 = vld [vmem:[%s7 + $0x10] sm:$0xff]
    %v512 = vld [vmem:[%s7 + $0x18] sm:$0xff]
    %v513 = vld [vmem:[%s8] sm:$0x1]
    %v515 = vlaneseq
    %v516 = vshrl.u32 %v515, 7
    %v517 = vsub.s32 0, %v516
    %v518 = vrot.slane %v513, %v517
    %v521 = vsel %vm173, %v508, 0
    %523 = vmatprep.subr.mxu0 0.0
    %524 = vmatpush1.msra.mxu0 %v509
    %525 = vmatprep.subr.mxu0 0.0
    %526 = vmatpush1.msra.mxu0 %v510
    %527 = vmatprep.subr.mxu0 0.0
    %528 = vmatpush1.msra.mxu0 %v511
    %529 = vmatprep.subr.mxu0 0.0
    %530 = vmatpush1.msra.mxu0 %v512
    %531 = vmatprep.subr.mxu0 0.0
    %532 = vmatpush1.msra.mxu0 0.0
    %533 = vmatprep.subr.mxu0 0.0
    %534 = vmatpush1.msra.mxu0 0.0
    %535 = vmatprep.subr.mxu0 0.0
    %536 = vmatpush1.msra.mxu0 0.0
    %537 = vmatprep.subr.mxu0 0.0
    %538 = vmatpush1.msra.mxu0 0.0
    %539 = vmatprep.subr.mxu0 0.0
    %540 = vmatpush1.msra.mxu0 0.0
    %541 = vmatprep.subr.mxu0 0.0
    %542 = vmatpush1.msra.mxu0 0.0
    %543 = vmatprep.subr.mxu0 0.0
    %544 = vmatpush1.msra.mxu0 0.0
    %545 = vmatprep.subr.mxu0 0.0
    %546 = vmatpush1.msra.mxu0 0.0
    %547 = vmatprep.subr.mxu0 0.0
    %548 = vmatpush1.msra.mxu0 0.0
    %549 = vmatprep.subr.mxu0 0.0
    %550 = vmatpush1.msra.mxu0 0.0
    %551 = vmatprep.subr.mxu0 0.0
    %552 = vmatpush1.msra.mxu0 0.0
    %553 = vmatprep.subr.mxu0 0.0
    %554 = vmatpush1.msra.mxu0 0.0
    %555 = vmatprep.subr.mxu0 0.0
    %556 = vmatpush1.msra.mxu0 0.0
    %557 = vmatprep.subr.mxu0 0.0
    %558 = vmatpush1.msra.mxu0 0.0
    %559 = vmatprep.subr.mxu0 0.0
    %560 = vmatpush1.msra.mxu0 0.0
    %561 = vmatprep.subr.mxu0 0.0
    %562 = vmatpush1.msra.mxu0 0.0
    %563 = vmatprep.subr.mxu0 0.0
    %564 = vmatpush1.msra.mxu0 0.0
    %565 = vmatprep.subr.mxu0 0.0
    %566 = vmatpush1.msra.mxu0 0.0
    %567 = vmatprep.subr.mxu0 0.0
    %568 = vmatpush1.msra.mxu0 0.0
    %569 = vmatprep.subr.mxu0 0.0
    %570 = vmatpush1.msra.mxu0 0.0
    %571 = vmatprep.subr.mxu0 0.0
    %572 = vmatpush1.msra.mxu0 0.0
    %573 = vmatprep.subr.mxu0 0.0
    %574 = vmatpush1.msra.mxu0 0.0
    %575 = vmatprep.subr.mxu0 0.0
    %576 = vmatpush1.msra.mxu0 0.0
    %577 = vmatprep.subr.mxu0 0.0
    %578 = vmatpush1.msra.mxu0 0.0
    %579 = vmatprep.subr.mxu0 0.0
    %580 = vmatpush1.msra.mxu0 0.0
    %581 = vmatprep.subr.mxu0 0.0
    %582 = vmatpush1.msra.mxu0 0.0
    %583 = vmatprep.subr.mxu0 0.0
    %584 = vmatpush1.msra.mxu0 0.0
    %585 = vmatprep.subr.mxu0 0.0
    %586 = vmatpush1.msra.mxu0 0.0
    %587 = vmatprep.mubr.f32.mxu0 0.0
    %588 = vmatmul.mubr.f32.gmra.mrb[0].mxu0 %v521
    %v589 = vpop.f32.mrb[0].mxu0
    %v590 = vadd.f32 %v518, %v589
    %v591 = vpop.f32.mrb[0].mxu0
    %592 = vdwg.mxu0
    %vm593 = vcmask 162816
    %594 = vst.msk [vmem:[%s9] sm:$0xff] %vm593, %v590
    %s595 = scalar_lea.vmem %s3, 64
    %v596 = vld [vmem:[%s595] sm:$0xff]
    %v597 = vld [vmem:[%s595 + $0x8] sm:$0xff]
    %v598 = vld [vmem:[%s595 + $0x10] sm:$0xff]
    %v599 = vld [vmem:[%s595 + $0x18] sm:$0xff]
    %s600 = scalar_lea.vmem [#allocation2], 2
    %v601 = vld [vmem:[%s600] sm:$0x1]
    %v603 = vlaneseq
    %v604 = vshrl.u32 %v603, 7
    %v605 = vsub.s32 0, %v604
    %v606 = vrot.slane %v601, %v605
    %608 = vmatprep.subr.mxu0 0.0
    %609 = vmatpush1.msra.mxu0 %v596
    %610 = vmatprep.subr.mxu0 0.0
    %611 = vmatpush1.msra.mxu0 %v597
    %612 = vmatprep.subr.mxu0 0.0
    %613 = vmatpush1.msra.mxu0 %v598
    %614 = vmatprep.subr.mxu0 0.0
    %615 = vmatpush1.msra.mxu0 %v599
    %616 = vmatprep.subr.mxu0 0.0
    %617 = vmatpush1.msra.mxu0 0.0
    %618 = vmatprep.subr.mxu0 0.0
    %619 = vmatpush1.msra.mxu0 0.0
    %620 = vmatprep.subr.mxu0 0.0
    %621 = vmatpush1.msra.mxu0 0.0
    %622 = vmatprep.subr.mxu0 0.0
    %623 = vmatpush1.msra.mxu0 0.0
    %624 = vmatprep.subr.mxu0 0.0
    %625 = vmatpush1.msra.mxu0 0.0
    %626 = vmatprep.subr.mxu0 0.0
    %627 = vmatpush1.msra.mxu0 0.0
    %628 = vmatprep.subr.mxu0 0.0
    %629 = vmatpush1.msra.mxu0 0.0
    %630 = vmatprep.subr.mxu0 0.0
    %631 = vmatpush1.msra.mxu0 0.0
    %632 = vmatprep.subr.mxu0 0.0
    %633 = vmatpush1.msra.mxu0 0.0
    %634 = vmatprep.subr.mxu0 0.0
    %635 = vmatpush1.msra.mxu0 0.0
    %636 = vmatprep.subr.mxu0 0.0
    %637 = vmatpush1.msra.mxu0 0.0
    %638 = vmatprep.subr.mxu0 0.0
    %639 = vmatpush1.msra.mxu0 0.0
    %640 = vmatprep.subr.mxu0 0.0
    %641 = vmatpush1.msra.mxu0 0.0
    %642 = vmatprep.subr.mxu0 0.0
    %643 = vmatpush1.msra.mxu0 0.0
    %644 = vmatprep.subr.mxu0 0.0
    %645 = vmatpush1.msra.mxu0 0.0
    %646 = vmatprep.subr.mxu0 0.0
    %647 = vmatpush1.msra.mxu0 0.0
    %648 = vmatprep.subr.mxu0 0.0
    %649 = vmatpush1.msra.mxu0 0.0
    %650 = vmatprep.subr.mxu0 0.0
    %651 = vmatpush1.msra.mxu0 0.0
    %652 = vmatprep.subr.mxu0 0.0
    %653 = vmatpush1.msra.mxu0 0.0
    %654 = vmatprep.subr.mxu0 0.0
    %655 = vmatpush1.msra.mxu0 0.0
    %656 = vmatprep.subr.mxu0 0.0
    %657 = vmatpush1.msra.mxu0 0.0
    %658 = vmatprep.subr.mxu0 0.0
    %659 = vmatpush1.msra.mxu0 0.0
    %660 = vmatprep.subr.mxu0 0.0
    %661 = vmatpush1.msra.mxu0 0.0
    %662 = vmatprep.subr.mxu0 0.0
    %663 = vmatpush1.msra.mxu0 0.0
    %664 = vmatprep.subr.mxu0 0.0
    %665 = vmatpush1.msra.mxu0 0.0
    %666 = vmatprep.subr.mxu0 0.0
    %667 = vmatpush1.msra.mxu0 0.0
    %668 = vmatprep.subr.mxu0 0.0
    %669 = vmatpush1.msra.mxu0 0.0
    %670 = vmatprep.subr.mxu0 0.0
    %671 = vmatpush1.msra.mxu0 0.0
    %672 = vmatprep.mubr.f32.mxu0 0.0
    %673 = vmatmul.mubr.f32.gmra.mrb[0].mxu0 %v521
    %v674 = vpop.f32.mrb[0].mxu0
    %v675 = vadd.f32 %v606, %v674
    %v676 = vpop.f32.mrb[0].mxu0
    %677 = vdwg.mxu0
    %v678 = vmax.f32 %v675, 0.0
    %s679 = scalar_lea.vmem %s5, 64
    %v680 = vld [vmem:[%s679] sm:$0xff]
    %v681 = vld [vmem:[%s679 + $0x8] sm:$0xff]
    %v682 = vld [vmem:[%s679 + $0x10] sm:$0xff]
    %v683 = vld [vmem:[%s679 + $0x18] sm:$0xff]
    %s684 = scalar_lea.vmem [#allocation4], 2
    %v685 = vld [vmem:[%s684] sm:$0x1]
    %v687 = vlaneseq
    %v688 = vshrl.u32 %v687, 7
    %v689 = vsub.s32 0, %v688
    %v690 = vrot.slane %v685, %v689
    %v693 = vsel %vm173, %v678, 0
    %695 = vmatprep.subr.mxu0 0.0
    %696 = vmatpush1.msra.mxu0 %v680
    %697 = vmatprep.subr.mxu0 0.0
    %698 = vmatpush1.msra.mxu0 %v681
    %699 = vmatprep.subr.mxu0 0.0
    %700 = vmatpush1.msra.mxu0 %v682
    %701 = vmatprep.subr.mxu0 0.0
    %702 = vmatpush1.msra.mxu0 %v683
    %703 = vmatprep.subr.mxu0 0.0
    %704 = vmatpush1.msra.mxu0 0.0
    %705 = vmatprep.subr.mxu0 0.0
    %706 = vmatpush1.msra.mxu0 0.0
    %707 = vmatprep.subr.mxu0 0.0
    %708 = vmatpush1.msra.mxu0 0.0
    %709 = vmatprep.subr.mxu0 0.0
    %710 = vmatpush1.msra.mxu0 0.0
    %711 = vmatprep.subr.mxu0 0.0
    %712 = vmatpush1.msra.mxu0 0.0
    %713 = vmatprep.subr.mxu0 0.0
    %714 = vmatpush1.msra.mxu0 0.0
    %715 = vmatprep.subr.mxu0 0.0
    %716 = vmatpush1.msra.mxu0 0.0
    %717 = vmatprep.subr.mxu0 0.0
    %718 = vmatpush1.msra.mxu0 0.0
    %719 = vmatprep.subr.mxu0 0.0
    %720 = vmatpush1.msra.mxu0 0.0
    %721 = vmatprep.subr.mxu0 0.0
    %722 = vmatpush1.msra.mxu0 0.0
    %723 = vmatprep.subr.mxu0 0.0
    %724 = vmatpush1.msra.mxu0 0.0
    %725 = vmatprep.subr.mxu0 0.0
    %726 = vmatpush1.msra.mxu0 0.0
    %727 = vmatprep.subr.mxu0 0.0
    %728 = vmatpush1.msra.mxu0 0.0
    %729 = vmatprep.subr.mxu0 0.0
    %730 = vmatpush1.msra.mxu0 0.0
    %731 = vmatprep.subr.mxu0 0.0
    %732 = vmatpush1.msra.mxu0 0.0
    %733 = vmatprep.subr.mxu0 0.0
    %734 = vmatpush1.msra.mxu0 0.0
    %735 = vmatprep.subr.mxu0 0.0
    %736 = vmatpush1.msra.mxu0 0.0
    %737 = vmatprep.subr.mxu0 0.0
    %738 = vmatpush1.msra.mxu0 0.0
    %739 = vmatprep.subr.mxu0 0.0
    %740 = vmatpush1.msra.mxu0 0.0
    %741 = vmatprep.subr.mxu0 0.0
    %742 = vmatpush1.msra.mxu0 0.0
    %743 = vmatprep.subr.mxu0 0.0
    %744 = vmatpush1.msra.mxu0 0.0
    %745 = vmatprep.subr.mxu0 0.0
    %746 = vmatpush1.msra.mxu0 0.0
    %747 = vmatprep.subr.mxu0 0.0
    %748 = vmatpush1.msra.mxu0 0.0
    %749 = vmatprep.subr.mxu0 0.0
    %750 = vmatpush1.msra.mxu0 0.0
    %751 = vmatprep.subr.mxu0 0.0
    %752 = vmatpush1.msra.mxu0 0.0
    %753 = vmatprep.subr.mxu0 0.0
    %754 = vmatpush1.msra.mxu0 0.0
    %755 = vmatprep.subr.mxu0 0.0
    %756 = vmatpush1.msra.mxu0 0.0
    %757 = vmatprep.subr.mxu0 0.0
    %758 = vmatpush1.msra.mxu0 0.0
    %759 = vmatprep.mubr.f32.mxu0 0.0
    %760 = vmatmul.mubr.f32.gmra.mrb[0].mxu0 %v693
    %v761 = vpop.f32.mrb[0].mxu0
    %v762 = vadd.f32 %v690, %v761
    %v763 = vpop.f32.mrb[0].mxu0
    %764 = vdwg.mxu0
    %v765 = vadd.f32 %v508, %v762
    %v766 = vmax.f32 %v765, 0.0
    %s767 = scalar_lea.vmem %s3, 96
    %v768 = vld [vmem:[%s767] sm:$0xff]
    %v769 = vld [vmem:[%s767 + $0x8] sm:$0xff]
    %v770 = vld [vmem:[%s767 + $0x10] sm:$0xff]
    %v771 = vld [vmem:[%s767 + $0x18] sm:$0xff]
    %s772 = scalar_lea.vmem [#allocation2], 3
    %v773 = vld [vmem:[%s772] sm:$0x1]
    %v775 = vlaneseq
    %v776 = vshrl.u32 %v775, 7
    %v777 = vsub.s32 0, %v776
    %v778 = vrot.slane %v773, %v777
    %v781 = vsel %vm173, %v766, 0
    %783 = vmatprep.subr.mxu0 0.0
    %784 = vmatpush1.msra.mxu0 %v768
    %785 = vmatprep.subr.mxu0 0.0
    %786 = vmatpush1.msra.mxu0 %v769
    %787 = vmatprep.subr.mxu0 0.0
    %788 = vmatpush1.msra.mxu0 %v770
    %789 = vmatprep.subr.mxu0 0.0
    %790 = vmatpush1.msra.mxu0 %v771
    %791 = vmatprep.subr.mxu0 0.0
    %792 = vmatpush1.msra.mxu0 0.0
    %793 = vmatprep.subr.mxu0 0.0
    %794 = vmatpush1.msra.mxu0 0.0
    %795 = vmatprep.subr.mxu0 0.0
    %796 = vmatpush1.msra.mxu0 0.0
    %797 = vmatprep.subr.mxu0 0.0
    %798 = vmatpush1.msra.mxu0 0.0
    %799 = vmatprep.subr.mxu0 0.0
    %800 = vmatpush1.msra.mxu0 0.0
    %801 = vmatprep.subr.mxu0 0.0
    %802 = vmatpush1.msra.mxu0 0.0
    %803 = vmatprep.subr.mxu0 0.0
    %804 = vmatpush1.msra.mxu0 0.0
    %805 = vmatprep.subr.mxu0 0.0
    %806 = vmatpush1.msra.mxu0 0.0
    %807 = vmatprep.subr.mxu0 0.0
    %808 = vmatpush1.msra.mxu0 0.0
    %809 = vmatprep.subr.mxu0 0.0
    %810 = vmatpush1.msra.mxu0 0.0
    %811 = vmatprep.subr.mxu0 0.0
    %812 = vmatpush1.msra.mxu0 0.0
    %813 = vmatprep.subr.mxu0 0.0
    %814 = vmatpush1.msra.mxu0 0.0
    %815 = vmatprep.subr.mxu0 0.0
    %816 = vmatpush1.msra.mxu0 0.0
    %817 = vmatprep.subr.mxu0 0.0
    %818 = vmatpush1.msra.mxu0 0.0
    %819 = vmatprep.subr.mxu0 0.0
    %820 = vmatpush1.msra.mxu0 0.0
    %821 = vmatprep.subr.mxu0 0.0
    %822 = vmatpush1.msra.mxu0 0.0
    %823 = vmatprep.subr.mxu0 0.0
    %824 = vmatpush1.msra.mxu0 0.0
    %825 = vmatprep.subr.mxu0 0.0
    %826 = vmatpush1.msra.mxu0 0.0
    %827 = vmatprep.subr.mxu0 0.0
    %828 = vmatpush1.msra.mxu0 0.0
    %829 = vmatprep.subr.mxu0 0.0
    %830 = vmatpush1.msra.mxu0 0.0
    %831 = vmatprep.subr.mxu0 0.0
    %832 = vmatpush1.msra.mxu0 0.0
    %833 = vmatprep.subr.mxu0 0.0
    %834 = vmatpush1.msra.mxu0 0.0
    %835 = vmatprep.subr.mxu0 0.0
    %836 = vmatpush1.msra.mxu0 0.0
    %837 = vmatprep.subr.mxu0 0.0
    %838 = vmatpush1.msra.mxu0 0.0
    %839 = vmatprep.subr.mxu0 0.0
    %840 = vmatpush1.msra.mxu0 0.0
    %841 = vmatprep.subr.mxu0 0.0
    %842 = vmatpush1.msra.mxu0 0.0
    %843 = vmatprep.subr.mxu0 0.0
    %844 = vmatpush1.msra.mxu0 0.0
    %845 = vmatprep.subr.mxu0 0.0
    %846 = vmatpush1.msra.mxu0 0.0
    %847 = vmatprep.mubr.f32.mxu0 0.0
    %848 = vmatmul.mubr.f32.gmra.mrb[0].mxu0 %v781
    %v849 = vpop.f32.mrb[0].mxu0
    %v850 = vadd.f32 %v778, %v849
    %v851 = vpop.f32.mrb[0].mxu0
    %852 = vdwg.mxu0
    %v853 = vmax.f32 %v850, 0.0
    %s854 = scalar_lea.vmem %s5, 96
    %v855 = vld [vmem:[%s854] sm:$0xff]
    %v856 = vld [vmem:[%s854 + $0x8] sm:$0xff]
    %v857 = vld [vmem:[%s854 + $0x10] sm:$0xff]
    %v858 = vld [vmem:[%s854 + $0x18] sm:$0xff]
    %s859 = scalar_lea.vmem [#allocation4], 3
    %v860 = vld [vmem:[%s859] sm:$0x1]
    %v862 = vlaneseq
    %v863 = vshrl.u32 %v862, 7
    %v864 = vsub.s32 0, %v863
    %v865 = vrot.slane %v860, %v864
    %v868 = vsel %vm173, %v853, 0
    %870 = vmatprep.subr.mxu0 0.0
    %871 = vmatpush1.msra.mxu0 %v855
    %872 = vmatprep.subr.mxu0 0.0
    %873 = vmatpush1.msra.mxu0 %v856
    %874 = vmatprep.subr.mxu0 0.0
    %875 = vmatpush1.msra.mxu0 %v857
    %876 = vmatprep.subr.mxu0 0.0
    %877 = vmatpush1.msra.mxu0 %v858
    %878 = vmatprep.subr.mxu0 0.0
    %879 = vmatpush1.msra.mxu0 0.0
    %880 = vmatprep.subr.mxu0 0.0
    %881 = vmatpush1.msra.mxu0 0.0
    %882 = vmatprep.subr.mxu0 0.0
    %883 = vmatpush1.msra.mxu0 0.0
    %884 = vmatprep.subr.mxu0 0.0
    %885 = vmatpush1.msra.mxu0 0.0
    %886 = vmatprep.subr.mxu0 0.0
    %887 = vmatpush1.msra.mxu0 0.0
    %888 = vmatprep.subr.mxu0 0.0
    %889 = vmatpush1.msra.mxu0 0.0
    %890 = vmatprep.subr.mxu0 0.0
    %891 = vmatpush1.msra.mxu0 0.0
    %892 = vmatprep.subr.mxu0 0.0
    %893 = vmatpush1.msra.mxu0 0.0
    %894 = vmatprep.subr.mxu0 0.0
    %895 = vmatpush1.msra.mxu0 0.0
    %896 = vmatprep.subr.mxu0 0.0
    %897 = vmatpush1.msra.mxu0 0.0
    %898 = vmatprep.subr.mxu0 0.0
    %899 = vmatpush1.msra.mxu0 0.0
    %900 = vmatprep.subr.mxu0 0.0
    %901 = vmatpush1.msra.mxu0 0.0
    %902 = vmatprep.subr.mxu0 0.0
    %903 = vmatpush1.msra.mxu0 0.0
    %904 = vmatprep.subr.mxu0 0.0
    %905 = vmatpush1.msra.mxu0 0.0
    %906 = vmatprep.subr.mxu0 0.0
    %907 = vmatpush1.msra.mxu0 0.0
    %908 = vmatprep.subr.mxu0 0.0
    %909 = vmatpush1.msra.mxu0 0.0
    %910 = vmatprep.subr.mxu0 0.0
    %911 = vmatpush1.msra.mxu0 0.0
    %912 = vmatprep.subr.mxu0 0.0
    %913 = vmatpush1.msra.mxu0 0.0
    %914 = vmatprep.subr.mxu0 0.0
    %915 = vmatpush1.msra.mxu0 0.0
    %916 = vmatprep.subr.mxu0 0.0
    %917 = vmatpush1.msra.mxu0 0.0
    %918 = vmatprep.subr.mxu0 0.0
    %919 = vmatpush1.msra.mxu0 0.0
    %920 = vmatprep.subr.mxu0 0.0
    %921 = vmatpush1.msra.mxu0 0.0
    %922 = vmatprep.subr.mxu0 0.0
    %923 = vmatpush1.msra.mxu0 0.0
    %924 = vmatprep.subr.mxu0 0.0
    %925 = vmatpush1.msra.mxu0 0.0
    %926 = vmatprep.subr.mxu0 0.0
    %927 = vmatpush1.msra.mxu0 0.0
    %928 = vmatprep.subr.mxu0 0.0
    %929 = vmatpush1.msra.mxu0 0.0
    %930 = vmatprep.subr.mxu0 0.0
    %931 = vmatpush1.msra.mxu0 0.0
    %932 = vmatprep.subr.mxu0 0.0
    %933 = vmatpush1.msra.mxu0 0.0
    %934 = vmatprep.mubr.f32.mxu0 0.0
    %935 = vmatmul.mubr.f32.gmra.mrb[0].mxu0 %v868
    %v936 = vpop.f32.mrb[0].mxu0
    %v937 = vadd.f32 %v865, %v936
    %v938 = vpop.f32.mrb[0].mxu0
    %939 = vdwg.mxu0
    %v940 = vadd.f32 %v766, %v937
    %v941 = vmax.f32 %v940, 0.0
    %s942 = scalar_lea.vmem %s7, 32
    %v943 = vld [vmem:[%s942] sm:$0xff]
    %v944 = vld [vmem:[%s942 + $0x8] sm:$0xff]
    %v945 = vld [vmem:[%s942 + $0x10] sm:$0xff]
    %v946 = vld [vmem:[%s942 + $0x18] sm:$0xff]
    %s947 = scalar_lea.vmem %s8, 1
    %v948 = vld [vmem:[%s947] sm:$0x1]
    %v950 = vlaneseq
    %v951 = vshrl.u32 %v950, 7
    %v952 = vsub.s32 0, %v951
    %v953 = vrot.slane %v948, %v952
    %v956 = vsel %vm173, %v941, 0
    %958 = vmatprep.subr.mxu0 0.0
    %959 = vmatpush1.msra.mxu0 %v943
    %960 = vmatprep.subr.mxu0 0.0
    %961 = vmatpush1.msra.mxu0 %v944
    %962 = vmatprep.subr.mxu0 0.0
    %963 = vmatpush1.msra.mxu0 %v945
    %964 = vmatprep.subr.mxu0 0.0
    %965 = vmatpush1.msra.mxu0 %v946
    %966 = vmatprep.subr.mxu0 0.0
    %967 = vmatpush1.msra.mxu0 0.0
    %968 = vmatprep.subr.mxu0 0.0
    %969 = vmatpush1.msra.mxu0 0.0
    %970 = vmatprep.subr.mxu0 0.0
    %971 = vmatpush1.msra.mxu0 0.0
    %972 = vmatprep.subr.mxu0 0.0
    %973 = vmatpush1.msra.mxu0 0.0
    %974 = vmatprep.subr.mxu0 0.0
    %975 = vmatpush1.msra.mxu0 0.0
    %976 = vmatprep.subr.mxu0 0.0
    %977 = vmatpush1.msra.mxu0 0.0
    %978 = vmatprep.subr.mxu0 0.0
    %979 = vmatpush1.msra.mxu0 0.0
    %980 = vmatprep.subr.mxu0 0.0
    %981 = vmatpush1.msra.mxu0 0.0
    %982 = vmatprep.subr.mxu0 0.0
    %983 = vmatpush1.msra.mxu0 0.0
    %984 = vmatprep.subr.mxu0 0.0
    %985 = vmatpush1.msra.mxu0 0.0
    %986 = vmatprep.subr.mxu0 0.0
    %987 = vmatpush1.msra.mxu0 0.0
    %988 = vmatprep.subr.mxu0 0.0
    %989 = vmatpush1.msra.mxu0 0.0
    %990 = vmatprep.subr.mxu0 0.0
    %991 = vmatpush1.msra.mxu0 0.0
    %992 = vmatprep.subr.mxu0 0.0
    %993 = vmatpush1.msra.mxu0 0.0
    %994 = vmatprep.subr.mxu0 0.0
    %995 = vmatpush1.msra.mxu0 0.0
    %996 = vmatprep.subr.mxu0 0.0
    %997 = vmatpush1.msra.mxu0 0.0
    %998 = vmatprep.subr.mxu0 0.0
    %999 = vmatpush1.msra.mxu0 0.0
    %1000 = vmatprep.subr.mxu0 0.0
    %1001 = vmatpush1.msra.mxu0 0.0
    %1002 = vmatprep.subr.mxu0 0.0
    %1003 = vmatpush1.msra.mxu0 0.0
    %1004 = vmatprep.subr.mxu0 0.0
    %1005 = vmatpush1.msra.mxu0 0.0
    %1006 = vmatprep.subr.mxu0 0.0
    %1007 = vmatpush1.msra.mxu0 0.0
    %1008 = vmatprep.subr.mxu0 0.0
    %1009 = vmatpush1.msra.mxu0 0.0
    %1010 = vmatprep.subr.mxu0 0.0
    %1011 = vmatpush1.msra.mxu0 0.0
    %1012 = vmatprep.subr.mxu0 0.0
    %1013 = vmatpush1.msra.mxu0 0.0
    %1014 = vmatprep.subr.mxu0 0.0
    %1015 = vmatpush1.msra.mxu0 0.0
    %1016 = vmatprep.subr.mxu0 0.0
    %1017 = vmatpush1.msra.mxu0 0.0
    %1018 = vmatprep.subr.mxu0 0.0
    %1019 = vmatpush1.msra.mxu0 0.0
    %1020 = vmatprep.subr.mxu0 0.0
    %1021 = vmatpush1.msra.mxu0 0.0
    %1022 = vmatprep.mubr.f32.mxu0 0.0
    %1023 = vmatmul.mubr.f32.gmra.mrb[0].mxu0 %v956
    %v1024 = vpop.f32.mrb[0].mxu0
    %v1025 = vadd.f32 %v953, %v1024
    %v1026 = vpop.f32.mrb[0].mxu0
    %1027 = vdwg.mxu0
    %s1028 = scalar_lea.vmem %s9, 8
    %1029 = vst.msk [vmem:[%s1028] sm:$0xff] %vm593, %v1025
    // Predicated region
    $region46: #{model_forward.1} parent=1 // pred_check
      _
    $region47: #{model_forward.1} parent=1 // pred_check_branch
      %1031 = sbr.rel (0) target = $region49
    $region48: #{model_forward.1} parent=1 // pred_region
      _
    $region49: #{model_forward.1} parent=1 // pred_fallthru
      _
    // Predicated region
    $region50: #{model_forward.1} parent=1 // pred_check
      _
    $region51: #{model_forward.1} parent=1 // pred_check_branch
      %1033 = sbr.rel (0) target = $region53
    $region52: #{model_forward.1} parent=1 // pred_region
      _
    $region53: #{model_forward.1} parent=1 // pred_fallthru
      _
    %1034 = vsyncpa [#allocation3], 1
    %1035 = vsyncpa [#allocation5], 1

</llo_original>
